<compile_context>
chip_gen: v6e
topology: v6e:2x2x1
jax: 0.10.0
libtpu: 0.0.40
codegen_flags: <defaults>
</compile_context>

<pallas_src>
import functools

import jax
import jax.numpy as jnp
from jax.experimental import pallas as pl
from jax.experimental.pallas import tpu as pltpu

LANE = 128      # vreg lane width
SUBLANE = 8     # f32 sublane count


def _round_up(n: int, m: int) -> int:
    return ((n + m - 1) // m) * m


def mlp_kernel(x_ref,
               w1_ref, b1_ref,
               w2_ref, b2_ref,
               w3_ref, b3_ref,
               w4_ref, b4_ref,
               o_ref):
    """Fused 4-layer MLP: three hidden linears, output linear, final ReLU.

    All refs are lane-dense (last dim a multiple of 128).  Weights may be
    bf16; accumulation is always f32; bias add + ReLU stay in f32.
    """
    wdt = w1_ref.dtype
    h = x_ref[...]                                         # (TB, IN_P) f32
    # hidden_l1 .. hidden_l3, output_l4 (no activation between layers).
    h = jnp.dot(h.astype(wdt), w1_ref[...],
                preferred_element_type=jnp.float32) + b1_ref[...]
    h = jnp.dot(h.astype(wdt), w2_ref[...],
                preferred_element_type=jnp.float32) + b2_ref[...]
    h = jnp.dot(h.astype(wdt), w3_ref[...],
                preferred_element_type=jnp.float32) + b3_ref[...]
    h = jnp.dot(h.astype(wdt), w4_ref[...],
                preferred_element_type=jnp.float32) + b4_ref[...]
    # activation_fn (ReLU) applied only after the output layer, in f32.
    o_ref[...] = jnp.maximum(h, 0.0).astype(o_ref.dtype)
    # TODO(synk): for very large TB / hidden dims, stage `h` through an
    # explicit pltpu.VMEM scratch instead of relying on regalloc.


@functools.partial(jax.jit, static_argnames=("tb_max",))
def three_hidden_layer_mlp(x, params, *, tb_max: int = 512):
    """x: (B, input_size) f32.  params: transposed weights w1..w4 with shape
    (in_features, out_features) and biases b1..b4 with shape (1, out)."""
    b, in_dim = x.shape
    dims = [in_dim] + [int(params[f"w{i}"].shape[1]) for i in range(1, 5)]
    pdims = [_round_up(d, LANE) for d in dims]             # lane-padded dims
    out_dim = dims[4]

    # Batch tile: multiple of 8 sublanes, capped at tb_max.
    tb = min(tb_max, _round_up(b, SUBLANE))
    b_pad = _round_up(b, tb)

    # Zero-pad to lane-dense shapes (exact: zero rows/cols contribute 0).
    x_p = jnp.pad(x, ((0, b_pad - b), (0, pdims[0] - in_dim)))
    padded = [x_p]
    for i in range(1, 5):
        w = params[f"w{i}"]
        bias = params[f"b{i}"]
        padded.append(jnp.pad(w, ((0, pdims[i - 1] - w.shape[0]),
                                  (0, pdims[i] - w.shape[1]))))
        padded.append(jnp.pad(bias, ((0, 0), (0, pdims[i] - bias.shape[1]))))

    grid = (pl.cdiv(b_pad, tb),)

    in_specs = [pl.BlockSpec((tb, pdims[0]), lambda i: (i, 0))]
    for li in range(4):
        # Constant index_maps -> weights/biases stay VMEM-resident across the
        # batch grid (DMA'd once, no re-DMA per step).
        in_specs.append(pl.BlockSpec((pdims[li], pdims[li + 1]),
                                     lambda i: (0, 0)))
        in_specs.append(pl.BlockSpec((1, pdims[li + 1]), lambda i: (0, 0)))
    out_specs = pl.BlockSpec((tb, pdims[4]), lambda i: (i, 0))

    # Explicit VMEM budget: double-buffered x/out tiles + resident weights +
    # intermediate activations + headroom; clamped to v7x's 64 MiB.
    nbytes = lambda a: a.size * a.dtype.itemsize
    resident = sum(nbytes(a) for a in padded[1:])          # weights + biases
    io_tiles = tb * pdims[0] * x.dtype.itemsize + tb * pdims[4] * 4
    vmem_limit = min(resident
                     + 2 * io_tiles                        # double-buffered I/O
                     + 3 * tb * max(pdims) * 4             # live activations
                     + (4 << 20),                          # headroom
                     64 << 20)

    out_p = pl.pallas_call(
        mlp_kernel,
        out_shape=jax.ShapeDtypeStruct((b_pad, pdims[4]), jnp.float32),
        grid=grid,
        in_specs=in_specs,
        out_specs=out_specs,
        compiler_params=pltpu.CompilerParams(
            dimension_semantics=("parallel",),
            vmem_limit_bytes=int(vmem_limit)),
    )(*padded)

    return out_p[:b, :out_dim]


def init_params(key, input_size, hidden_sizes, output_size,
                weight_dtype=jnp.bfloat16):
    """nn.Linear-style init (uniform +/- 1/sqrt(fan_in)).  Weights are stored
    transposed (in_features, out_features) in `weight_dtype`; biases stay f32
    since the in-kernel elementwise math is f32."""
    sizes = [input_size] + list(hidden_sizes) + [output_size]
    params = {}
    for i in range(4):
        fan_in, fan_out = sizes[i], sizes[i + 1]
        key, kw, kb = jax.random.split(key, 3)
        bound = 1.0 / (fan_in ** 0.5)
        params[f"w{i+1}"] = jax.random.uniform(
            kw, (fan_in, fan_out), jnp.float32, -bound, bound
        ).astype(weight_dtype)
        params[f"b{i+1}"] = jax.random.uniform(
            kb, (1, fan_out), jnp.float32, -bound, bound)
    return params


if __name__ == "__main__":
    # Small shapes consistent with the module: (batch, input_size) features.
    batch = 8
    input_size = 16
    hidden_layer_sizes = [32, 32, 32, 32]   # module only uses the first three
    output_size = 8

    key = jax.random.PRNGKey(0)
    key, kx = jax.random.split(key)
    x = jax.random.normal(kx, (batch, input_size), jnp.float32)

    params = init_params(key, input_size, hidden_layer_sizes[:3], output_size)

    out = three_hidden_layer_mlp(x, params)
    out = jax.block_until_ready(out)

    # Pure-JAX reference using the identical dtype path (bf16 dots, f32 acc).
    h = x
    for i in range(1, 5):
        w = params[f"w{i}"]
        h = jnp.dot(h.astype(w.dtype), w,
                    preferred_element_type=jnp.float32) + params[f"b{i}"]
    ref = jnp.maximum(h, 0.0)

    assert out.shape == (batch, output_size)
    assert jnp.allclose(out, ref, atol=1e-4, rtol=1e-4), \
        f"max err {jnp.max(jnp.abs(out - ref))}"

    print("KERNEL_OK")
</pallas_src>

<mosaic_0001>
module attributes {stable_mosaic.version = 11 : i64} {
  func.func @mlp_kernel(%arg0: i32, %arg1: memref<8x128xf32, #tpu.memory_space<vmem>>, %arg2: memref<128x128xbf16, #tpu.memory_space<vmem>>, %arg3: memref<1x128xf32, #tpu.memory_space<vmem>>, %arg4: memref<128x128xbf16, #tpu.memory_space<vmem>>, %arg5: memref<1x128xf32, #tpu.memory_space<vmem>>, %arg6: memref<128x128xbf16, #tpu.memory_space<vmem>>, %arg7: memref<1x128xf32, #tpu.memory_space<vmem>>, %arg8: memref<128x128xbf16, #tpu.memory_space<vmem>>, %arg9: memref<1x128xf32, #tpu.memory_space<vmem>>, %arg10: memref<8x128xf32, #tpu.memory_space<vmem>>) attributes {dimension_semantics = [#tpu.dimension_semantics<parallel>], iteration_bounds = array<i64: 1>, scalar_prefetch = 0 : i64, scratch_operands = 0 : i64, tpu.core_type = #tpu.core_type<tc>, window_params = [{transform_indices = @transform_0, window_bounds = array<i64: 8, 128>}, {pipeline_mode = #tpu.pipeline_mode<synchronous>, transform_indices = @transform_1, window_bounds = array<i64: 128, 128>}, {pipeline_mode = #tpu.pipeline_mode<synchronous>, transform_indices = @transform_2, window_bounds = array<i64: 1, 128>}, {pipeline_mode = #tpu.pipeline_mode<synchronous>, transform_indices = @transform_3, window_bounds = array<i64: 128, 128>}, {pipeline_mode = #tpu.pipeline_mode<synchronous>, transform_indices = @transform_4, window_bounds = array<i64: 1, 128>}, {pipeline_mode = #tpu.pipeline_mode<synchronous>, transform_indices = @transform_5, window_bounds = array<i64: 128, 128>}, {pipeline_mode = #tpu.pipeline_mode<synchronous>, transform_indices = @transform_6, window_bounds = array<i64: 1, 128>}, {pipeline_mode = #tpu.pipeline_mode<synchronous>, transform_indices = @transform_7, window_bounds = array<i64: 128, 128>}, {pipeline_mode = #tpu.pipeline_mode<synchronous>, transform_indices = @transform_8, window_bounds = array<i64: 1, 128>}, {transform_indices = @transform_9, window_bounds = array<i64: 8, 128>}]} {
    %c0 = arith.constant 0 : index
    %c0_0 = arith.constant 0 : index
    %0 = vector.load %arg1[%c0, %c0_0] : memref<8x128xf32, #tpu.memory_space<vmem>>, vector<8x128xf32>
    %1 = arith.truncf %0 : vector<8x128xf32> to vector<8x128xbf16>
    %c0_1 = arith.constant 0 : index
    %c0_2 = arith.constant 0 : index
    %2 = vector.load %arg2[%c0_1, %c0_2] : memref<128x128xbf16, #tpu.memory_space<vmem>>, vector<128x128xbf16>
    %cst = arith.constant dense<0.000000e+00> : vector<8x128xf32>
    %3 = tpu.matmul %1, %2, %cst {dimension_numbers = #tpu.dot_dimension_numbers<[1], [0], [0], [1], [0, 0, 1, 1], [], []>} : vector<8x128xbf16>, vector<128x128xbf16>, vector<8x128xf32> -> vector<8x128xf32>
    %c0_3 = arith.constant 0 : index
    %c0_4 = arith.constant 0 : index
    %4 = vector.load %arg3[%c0_3, %c0_4] : memref<1x128xf32, #tpu.memory_space<vmem>>, vector<1x128xf32>
    %5 = vector.broadcast %4 : vector<1x128xf32> to vector<8x128xf32>
    %6 = arith.addf %3, %5 : vector<8x128xf32>
    %7 = arith.truncf %6 : vector<8x128xf32> to vector<8x128xbf16>
    %c0_5 = arith.constant 0 : index
    %c0_6 = arith.constant 0 : index
    %8 = vector.load %arg4[%c0_5, %c0_6] : memref<128x128xbf16, #tpu.memory_space<vmem>>, vector<128x128xbf16>
    %cst_7 = arith.constant dense<0.000000e+00> : vector<8x128xf32>
    %9 = tpu.matmul %7, %8, %cst_7 {dimension_numbers = #tpu.dot_dimension_numbers<[1], [0], [0], [1], [0, 0, 1, 1], [], []>} : vector<8x128xbf16>, vector<128x128xbf16>, vector<8x128xf32> -> vector<8x128xf32>
    %c0_8 = arith.constant 0 : index
    %c0_9 = arith.constant 0 : index
    %10 = vector.load %arg5[%c0_8, %c0_9] : memref<1x128xf32, #tpu.memory_space<vmem>>, vector<1x128xf32>
    %11 = vector.broadcast %10 : vector<1x128xf32> to vector<8x128xf32>
    %12 = arith.addf %9, %11 : vector<8x128xf32>
    %13 = arith.truncf %12 : vector<8x128xf32> to vector<8x128xbf16>
    %c0_10 = arith.constant 0 : index
    %c0_11 = arith.constant 0 : index
    %14 = vector.load %arg6[%c0_10, %c0_11] : memref<128x128xbf16, #tpu.memory_space<vmem>>, vector<128x128xbf16>
    %cst_12 = arith.constant dense<0.000000e+00> : vector<8x128xf32>
    %15 = tpu.matmul %13, %14, %cst_12 {dimension_numbers = #tpu.dot_dimension_numbers<[1], [0], [0], [1], [0, 0, 1, 1], [], []>} : vector<8x128xbf16>, vector<128x128xbf16>, vector<8x128xf32> -> vector<8x128xf32>
    %c0_13 = arith.constant 0 : index
    %c0_14 = arith.constant 0 : index
    %16 = vector.load %arg7[%c0_13, %c0_14] : memref<1x128xf32, #tpu.memory_space<vmem>>, vector<1x128xf32>
    %17 = vector.broadcast %16 : vector<1x128xf32> to vector<8x128xf32>
    %18 = arith.addf %15, %17 : vector<8x128xf32>
    %19 = arith.truncf %18 : vector<8x128xf32> to vector<8x128xbf16>
    %c0_15 = arith.constant 0 : index
    %c0_16 = arith.constant 0 : index
    %20 = vector.load %arg8[%c0_15, %c0_16] : memref<128x128xbf16, #tpu.memory_space<vmem>>, vector<128x128xbf16>
    %cst_17 = arith.constant dense<0.000000e+00> : vector<8x128xf32>
    %21 = tpu.matmul %19, %20, %cst_17 {dimension_numbers = #tpu.dot_dimension_numbers<[1], [0], [0], [1], [0, 0, 1, 1], [], []>} : vector<8x128xbf16>, vector<128x128xbf16>, vector<8x128xf32> -> vector<8x128xf32>
    %c0_18 = arith.constant 0 : index
    %c0_19 = arith.constant 0 : index
    %22 = vector.load %arg9[%c0_18, %c0_19] : memref<1x128xf32, #tpu.memory_space<vmem>>, vector<1x128xf32>
    %23 = vector.broadcast %22 : vector<1x128xf32> to vector<8x128xf32>
    %24 = arith.addf %21, %23 : vector<8x128xf32>
    %cst_20 = arith.constant 0.000000e+00 : f32
    %25 = vector.broadcast %cst_20 : f32 to vector<8x128xf32>
    %26 = arith.maximumf %24, %25 : vector<8x128xf32>
    %c0_21 = arith.constant 0 : index
    %c0_22 = arith.constant 0 : index
    %27 = vector.load %arg10[%c0_21, %c0_22] : memref<8x128xf32, #tpu.memory_space<vmem>>, vector<8x128xf32>
    tpu.vector_store %arg10[%c0_21, %c0_22], %26 {strides = array<i32>} : memref<8x128xf32, #tpu.memory_space<vmem>>, vector<8x128xf32>,
    return
  }
  func.func @transform_0(%arg0: i32) -> (i32, i32) {
    %c0_i32 = arith.constant 0 : i32
    %c0_i32_0 = arith.constant 0 : i32
    return %arg0, %c0_i32 : i32, i32
  }
  func.func @transform_1(%arg0: i32) -> (i32, i32) {
    %c0_i32 = arith.constant 0 : i32
    %c0_i32_0 = arith.constant 0 : i32
    %c0_i32_1 = arith.constant 0 : i32
    return %c0_i32, %c0_i32_0 : i32, i32
  }
  func.func @transform_2(%arg0: i32) -> (i32, i32) {
    %c0_i32 = arith.constant 0 : i32
    %c0_i32_0 = arith.constant 0 : i32
    %c0_i32_1 = arith.constant 0 : i32
    return %c0_i32, %c0_i32_0 : i32, i32
  }
  func.func @transform_3(%arg0: i32) -> (i32, i32) {
    %c0_i32 = arith.constant 0 : i32
    %c0_i32_0 = arith.constant 0 : i32
    %c0_i32_1 = arith.constant 0 : i32
    return %c0_i32, %c0_i32_0 : i32, i32
  }
  func.func @transform_4(%arg0: i32) -> (i32, i32) {
    %c0_i32 = arith.constant 0 : i32
    %c0_i32_0 = arith.constant 0 : i32
    %c0_i32_1 = arith.constant 0 : i32
    return %c0_i32, %c0_i32_0 : i32, i32
  }
  func.func @transform_5(%arg0: i32) -> (i32, i32) {
    %c0_i32 = arith.constant 0 : i32
    %c0_i32_0 = arith.constant 0 : i32
    %c0_i32_1 = arith.constant 0 : i32
    return %c0_i32, %c0_i32_0 : i32, i32
  }
  func.func @transform_6(%arg0: i32) -> (i32, i32) {
    %c0_i32 = arith.constant 0 : i32
    %c0_i32_0 = arith.constant 0 : i32
    %c0_i32_1 = arith.constant 0 : i32
    return %c0_i32, %c0_i32_0 : i32, i32
  }
  func.func @transform_7(%arg0: i32) -> (i32, i32) {
    %c0_i32 = arith.constant 0 : i32
    %c0_i32_0 = arith.constant 0 : i32
    %c0_i32_1 = arith.constant 0 : i32
    return %c0_i32, %c0_i32_0 : i32, i32
  }
  func.func @transform_8(%arg0: i32) -> (i32, i32) {
    %c0_i32 = arith.constant 0 : i32
    %c0_i32_0 = arith.constant 0 : i32
    %c0_i32_1 = arith.constant 0 : i32
    return %c0_i32, %c0_i32_0 : i32, i32
  }
  func.func @transform_9(%arg0: i32) -> (i32, i32) {
    %c0_i32 = arith.constant 0 : i32
    %c0_i32_0 = arith.constant 0 : i32
    return %arg0, %c0_i32 : i32, i32
  }
}

</mosaic_0001>

<llo_original>
// kernel: three_hidden_layer_mlp.1
$region0: #{three_hidden_layer_mlp.1}
  #allocation0 [shape = 'u32[]', space=smem, size = 0x4, offset = 0x4, fixed_abs, tag = 'smem constant byte address 0x4 - core index']
  #allocation1 [shape = 'u32[144,128]{1,0:T(1,128)}', space=vmem, size = 0x12000, scoped, tag = 'internal scratch']
  %s0 = inlined_call_operand.vmem [shape: f32[8,128], index: 0, kind: input, shape index: {}]
  %s1 = inlined_call_operand.vmem [shape: bf16[128,128], index: 1, kind: input, shape index: {}]
  %s2 = inlined_call_operand.vmem [shape: f32[1,128], index: 2, kind: input, shape index: {}]
  %s3 = inlined_call_operand.vmem [shape: bf16[128,128], index: 3, kind: input, shape index: {}]
  %s4 = inlined_call_operand.vmem [shape: f32[1,128], index: 4, kind: input, shape index: {}]
  %s5 = inlined_call_operand.vmem [shape: bf16[128,128], index: 5, kind: input, shape index: {}]
  %s6 = inlined_call_operand.vmem [shape: f32[1,128], index: 6, kind: input, shape index: {}]
  %s7 = inlined_call_operand.vmem [shape: bf16[128,128], index: 7, kind: input, shape index: {}]
  %s8 = inlined_call_operand.vmem [shape: f32[1,128], index: 8, kind: input, shape index: {}]
  %s9 = inlined_call_operand.hbm [shape: f32[8,128], index: 9, kind: output, shape index: {}]
  %s10 = sld [smem:[#allocation0]]
  $region46: #{three_hidden_layer_mlp.1} parent=0
    _
  %s12 = ssub.s32 1, %s10
  %s13 = scalar_select 0, %s12, %s10
  $region1: #{three_hidden_layer_mlp.1} parent=0
    #allocation2 [shape = 'u8[4096]{0}', space=vmem, size = 0x1000, scoped, tag = 'output window, operand 0, single buffered']
    #allocation3 [shape = 's32[1]{0}', space=sflag, size = 0x4, scoped, tag = 'scoped memory for three_hidden_layer_mlp.1']
    %14 = vsyncpa [#allocation3], 0
    // Predicated region
    $region2: #{three_hidden_layer_mlp.1} parent=1 // pred_check
      _
    $region3: #{three_hidden_layer_mlp.1} parent=1 // pred_check_branch
      %16 = sbr.rel (0) target = $region5
    $region4: #{three_hidden_layer_mlp.1} parent=1 // pred_region
      _
    $region5: #{three_hidden_layer_mlp.1} parent=1 // pred_fallthru
      _
    // Predicated region
    $region6: #{three_hidden_layer_mlp.1} parent=1 // pred_check
      _
    $region7: #{three_hidden_layer_mlp.1} parent=1 // pred_check_branch
      %18 = sbr.rel (0) target = $region9
    $region8: #{three_hidden_layer_mlp.1} parent=1 // pred_region
      _
    $region9: #{three_hidden_layer_mlp.1} parent=1 // pred_fallthru
      _
    // Predicated region
    $region10: #{three_hidden_layer_mlp.1} parent=1 // pred_check
      _
    $region11: #{three_hidden_layer_mlp.1} parent=1 // pred_check_branch
      %20 = sbr.rel (0) target = $region13
    $region12: #{three_hidden_layer_mlp.1} parent=1 // pred_region
      _
    $region13: #{three_hidden_layer_mlp.1} parent=1 // pred_fallthru
      _
    // Predicated region
    $region14: #{three_hidden_layer_mlp.1} parent=1 // pred_check
      _
    $region15: #{three_hidden_layer_mlp.1} parent=1 // pred_check_branch
      %22 = sbr.rel (0) target = $region17
    $region16: #{three_hidden_layer_mlp.1} parent=1 // pred_region
      _
    $region17: #{three_hidden_layer_mlp.1} parent=1 // pred_fallthru
      _
    // Predicated region
    $region18: #{three_hidden_layer_mlp.1} parent=1 // pred_check
      _
    $region19: #{three_hidden_layer_mlp.1} parent=1 // pred_check_branch
      %24 = sbr.rel (0) target = $region21
    $region20: #{three_hidden_layer_mlp.1} parent=1 // pred_region
      _
    $region21: #{three_hidden_layer_mlp.1} parent=1 // pred_fallthru
      _
    // Predicated region
    $region22: #{three_hidden_layer_mlp.1} parent=1 // pred_check
      _
    $region23: #{three_hidden_layer_mlp.1} parent=1 // pred_check_branch
      %26 = sbr.rel (0) target = $region25
    $region24: #{three_hidden_layer_mlp.1} parent=1 // pred_region
      _
    $region25: #{three_hidden_layer_mlp.1} parent=1 // pred_fallthru
      _
    // Predicated region
    $region26: #{three_hidden_layer_mlp.1} parent=1 // pred_check
      _
    $region27: #{three_hidden_layer_mlp.1} parent=1 // pred_check_branch
      %28 = sbr.rel (0) target = $region29
    $region28: #{three_hidden_layer_mlp.1} parent=1 // pred_region
      _
    $region29: #{three_hidden_layer_mlp.1} parent=1 // pred_fallthru
      _
    // Predicated region
    $region30: #{three_hidden_layer_mlp.1} parent=1 // pred_check
      _
    $region31: #{three_hidden_layer_mlp.1} parent=1 // pred_check_branch
      %30 = sbr.rel (0) target = $region33
    $region32: #{three_hidden_layer_mlp.1} parent=1 // pred_region
      _
    $region33: #{three_hidden_layer_mlp.1} parent=1 // pred_fallthru
      _
    // Predicated region
    $region34: #{three_hidden_layer_mlp.1} parent=1 // pred_check
      _
    $region35: #{three_hidden_layer_mlp.1} parent=1 // pred_check_branch
      %32 = sbr.rel (0) target = $region37
    $region36: #{three_hidden_layer_mlp.1} parent=1 // pred_region
      _
    $region37: #{three_hidden_layer_mlp.1} parent=1 // pred_fallthru
      _
    %v34 = vld [vmem:[%s0] sm:$0xff]
    %v35 = vpack.c.bf16 %v34, %v34
    %v36 = vld [vmem:[%s1] sm:$0xf]
    %v37 = vld [vmem:[%s1 + $0x4] sm:$0xf]
    %v38 = vld [vmem:[%s1 + $0x8] sm:$0xf]
    %v39 = vld [vmem:[%s1 + $0xc] sm:$0xf]
    %v40 = vld [vmem:[%s1 + $0x10] sm:$0xf]
    %v41 = vld [vmem:[%s1 + $0x14] sm:$0xf]
    %v42 = vld [vmem:[%s1 + $0x18] sm:$0xf]
    %v43 = vld [vmem:[%s1 + $0x1c] sm:$0xf]
    %v44 = vld [vmem:[%s1 + $0x20] sm:$0xf]
    %v45 = vld [vmem:[%s1 + $0x24] sm:$0xf]
    %v46 = vld [vmem:[%s1 + $0x28] sm:$0xf]
    %v47 = vld [vmem:[%s1 + $0x2c] sm:$0xf]
    %v48 = vld [vmem:[%s1 + $0x30] sm:$0xf]
    %v49 = vld [vmem:[%s1 + $0x34] sm:$0xf]
    %v50 = vld [vmem:[%s1 + $0x38] sm:$0xf]
    %v51 = vld [vmem:[%s1 + $0x3c] sm:$0xf]
    %v52 = vld [vmem:[%s2] sm:$0x1]
    %v54 = vlaneseq
    %v55 = vshrl.u32 %v54, 7
    %v56 = vsub.s32 0, %v55
    %v57 = vrot.slane %v52, %v56
    %v75 = vunpack.c.l.b16 %v36
    %v76 = vunpack.c.l.b16 %v37
    %v77 = vunpack.c.l.b16 %v38
    %v78 = vunpack.c.l.b16 %v39
    %v79 = vunpack.c.l.b16 %v40
    %v80 = vunpack.c.l.b16 %v41
    %v81 = vunpack.c.l.b16 %v42
    %v82 = vunpack.c.l.b16 %v43
    %v83 = vunpack.c.l.b16 %v44
    %v84 = vunpack.c.l.b16 %v45
    %v85 = vunpack.c.l.b16 %v46
    %v86 = vunpack.c.l.b16 %v47
    %v87 = vunpack.c.l.b16 %v48
    %v88 = vunpack.c.l.b16 %v49
    %v89 = vunpack.c.l.b16 %v50
    %v90 = vunpack.c.l.b16 %v51
    %v91 = vpack.c.b16 %v76, %v75
    %v92 = vpack.c.b16 %v78, %v77
    %v93 = vpack.c.b16 %v80, %v79
    %v94 = vpack.c.b16 %v82, %v81
    %v95 = vpack.c.b16 %v84, %v83
    %v96 = vpack.c.b16 %v86, %v85
    %v97 = vpack.c.b16 %v88, %v87
    %v98 = vpack.c.b16 %v90, %v89
    %107 = vmatprep.subr.bf16.mxu0 0
    %108 = vmatpush1.bf16.msra.mxu0 %v98
    %109 = vmatprep.subr.bf16.mxu0 0
    %110 = vmatpush1.bf16.msra.mxu0 %v97
    %111 = vmatprep.subr.bf16.mxu0 0
    %112 = vmatpush1.bf16.msra.mxu0 %v96
    %113 = vmatprep.subr.bf16.mxu0 0
    %114 = vmatpush1.bf16.msra.mxu0 %v95
    %115 = vmatprep.subr.bf16.mxu0 0
    %116 = vmatpush1.bf16.msra.mxu0 %v94
    %117 = vmatprep.subr.bf16.mxu0 0
    %118 = vmatpush1.bf16.msra.mxu0 %v93
    %119 = vmatprep.subr.bf16.mxu0 0
    %120 = vmatpush1.bf16.msra.mxu0 %v92
    %121 = vmatprep.subr.bf16.mxu0 0
    %122 = vmatpush1.bf16.msra.mxu0 %v91
    %123 = vmatprep.subr.bf16.mxu0 0
    %124 = vmatpush2.bf16.msra.mxu0 0
    %125 = vmatprep.subr.bf16.mxu0 0
    %126 = vmatpush2.bf16.msra.mxu0 0
    %127 = vmatprep.subr.bf16.mxu0 0
    %128 = vmatpush2.bf16.msra.mxu0 0
    %129 = vmatprep.subr.bf16.mxu0 0
    %130 = vmatpush2.bf16.msra.mxu0 0
    %131 = vmatprep.subr.bf16.mxu0 0
    %132 = vmatpush2.bf16.msra.mxu0 0
    %133 = vmatprep.subr.bf16.mxu0 0
    %134 = vmatpush2.bf16.msra.mxu0 0
    %135 = vmatprep.subr.bf16.mxu0 0
    %136 = vmatpush2.bf16.msra.mxu0 0
    %137 = vmatprep.subr.bf16.mxu0 0
    %138 = vmatpush2.bf16.msra.mxu0 0
    %139 = vmatprep.mubr.bf16.mxu0 0
    %140 = vmatmul.mubr.bf16.gmra.mxu0 %v35
    %v141 = vpop.f32.mrf.mxu0
    %v142 = vadd.f32 %v57, %v141
    %v143 = vpop.f32.mrf.mxu0
    %v144 = vpop.f32.mrf.mxu0
    %v145 = vpop.f32.mrf.mxu0
    %146 = vdwg.mxu0
    %v147 = vpack.c.bf16 %v142, %v142
    %v148 = vld [vmem:[%s3] sm:$0xf]
    %v149 = vld [vmem:[%s3 + $0x4] sm:$0xf]
    %v150 = vld [vmem:[%s3 + $0x8] sm:$0xf]
    %v151 = vld [vmem:[%s3 + $0xc] sm:$0xf]
    %v152 = vld [vmem:[%s3 + $0x10] sm:$0xf]
    %v153 = vld [vmem:[%s3 + $0x14] sm:$0xf]
    %v154 = vld [vmem:[%s3 + $0x18] sm:$0xf]
    %v155 = vld [vmem:[%s3 + $0x1c] sm:$0xf]
    %v156 = vld [vmem:[%s3 + $0x20] sm:$0xf]
    %v157 = vld [vmem:[%s3 + $0x24] sm:$0xf]
    %v158 = vld [vmem:[%s3 + $0x28] sm:$0xf]
    %v159 = vld [vmem:[%s3 + $0x2c] sm:$0xf]
    %v160 = vld [vmem:[%s3 + $0x30] sm:$0xf]
    %v161 = vld [vmem:[%s3 + $0x34] sm:$0xf]
    %v162 = vld [vmem:[%s3 + $0x38] sm:$0xf]
    %v163 = vld [vmem:[%s3 + $0x3c] sm:$0xf]
    %v164 = vld [vmem:[%s4] sm:$0x1]
    %v166 = vlaneseq
    %v167 = vshrl.u32 %v166, 7
    %v168 = vsub.s32 0, %v167
    %v169 = vrot.slane %v164, %v168
    %v187 = vunpack.c.l.b16 %v148
    %v188 = vunpack.c.l.b16 %v149
    %v189 = vunpack.c.l.b16 %v150
    %v190 = vunpack.c.l.b16 %v151
    %v191 = vunpack.c.l.b16 %v152
    %v192 = vunpack.c.l.b16 %v153
    %v193 = vunpack.c.l.b16 %v154
    %v194 = vunpack.c.l.b16 %v155
    %v195 = vunpack.c.l.b16 %v156
    %v196 = vunpack.c.l.b16 %v157
    %v197 = vunpack.c.l.b16 %v158
    %v198 = vunpack.c.l.b16 %v159
    %v199 = vunpack.c.l.b16 %v160
    %v200 = vunpack.c.l.b16 %v161
    %v201 = vunpack.c.l.b16 %v162
    %v202 = vunpack.c.l.b16 %v163
    %v203 = vpack.c.b16 %v188, %v187
    %v204 = vpack.c.b16 %v190, %v189
    %v205 = vpack.c.b16 %v192, %v191
    %v206 = vpack.c.b16 %v194, %v193
    %v207 = vpack.c.b16 %v196, %v195
    %v208 = vpack.c.b16 %v198, %v197
    %v209 = vpack.c.b16 %v200, %v199
    %v210 = vpack.c.b16 %v202, %v201
    %219 = vmatprep.subr.bf16.mxu0 0
    %220 = vmatpush1.bf16.msra.mxu0 %v210
    %221 = vmatprep.subr.bf16.mxu0 0
    %222 = vmatpush1.bf16.msra.mxu0 %v209
    %223 = vmatprep.subr.bf16.mxu0 0
    %224 = vmatpush1.bf16.msra.mxu0 %v208
    %225 = vmatprep.subr.bf16.mxu0 0
    %226 = vmatpush1.bf16.msra.mxu0 %v207
    %227 = vmatprep.subr.bf16.mxu0 0
    %228 = vmatpush1.bf16.msra.mxu0 %v206
    %229 = vmatprep.subr.bf16.mxu0 0
    %230 = vmatpush1.bf16.msra.mxu0 %v205
    %231 = vmatprep.subr.bf16.mxu0 0
    %232 = vmatpush1.bf16.msra.mxu0 %v204
    %233 = vmatprep.subr.bf16.mxu0 0
    %234 = vmatpush1.bf16.msra.mxu0 %v203
    %235 = vmatprep.subr.bf16.mxu0 0
    %236 = vmatpush2.bf16.msra.mxu0 0
    %237 = vmatprep.subr.bf16.mxu0 0
    %238 = vmatpush2.bf16.msra.mxu0 0
    %239 = vmatprep.subr.bf16.mxu0 0
    %240 = vmatpush2.bf16.msra.mxu0 0
    %241 = vmatprep.subr.bf16.mxu0 0
    %242 = vmatpush2.bf16.msra.mxu0 0
    %243 = vmatprep.subr.bf16.mxu0 0
    %244 = vmatpush2.bf16.msra.mxu0 0
    %245 = vmatprep.subr.bf16.mxu0 0
    %246 = vmatpush2.bf16.msra.mxu0 0
    %247 = vmatprep.subr.bf16.mxu0 0
    %248 = vmatpush2.bf16.msra.mxu0 0
    %249 = vmatprep.subr.bf16.mxu0 0
    %250 = vmatpush2.bf16.msra.mxu0 0
    %251 = vmatprep.mubr.bf16.mxu0 0
    %252 = vmatmul.mubr.bf16.gmra.mxu0 %v147
    %v253 = vpop.f32.mrf.mxu0
    %v254 = vadd.f32 %v169, %v253
    %v255 = vpop.f32.mrf.mxu0
    %v256 = vpop.f32.mrf.mxu0
    %v257 = vpop.f32.mrf.mxu0
    %258 = vdwg.mxu0
    %v259 = vpack.c.bf16 %v254, %v254
    %v260 = vld [vmem:[%s5] sm:$0xf]
    %v261 = vld [vmem:[%s5 + $0x4] sm:$0xf]
    %v262 = vld [vmem:[%s5 + $0x8] sm:$0xf]
    %v263 = vld [vmem:[%s5 + $0xc] sm:$0xf]
    %v264 = vld [vmem:[%s5 + $0x10] sm:$0xf]
    %v265 = vld [vmem:[%s5 + $0x14] sm:$0xf]
    %v266 = vld [vmem:[%s5 + $0x18] sm:$0xf]
    %v267 = vld [vmem:[%s5 + $0x1c] sm:$0xf]
    %v268 = vld [vmem:[%s5 + $0x20] sm:$0xf]
    %v269 = vld [vmem:[%s5 + $0x24] sm:$0xf]
    %v270 = vld [vmem:[%s5 + $0x28] sm:$0xf]
    %v271 = vld [vmem:[%s5 + $0x2c] sm:$0xf]
    %v272 = vld [vmem:[%s5 + $0x30] sm:$0xf]
    %v273 = vld [vmem:[%s5 + $0x34] sm:$0xf]
    %v274 = vld [vmem:[%s5 + $0x38] sm:$0xf]
    %v275 = vld [vmem:[%s5 + $0x3c] sm:$0xf]
    %v276 = vld [vmem:[%s6] sm:$0x1]
    %v278 = vlaneseq
    %v279 = vshrl.u32 %v278, 7
    %v280 = vsub.s32 0, %v279
    %v281 = vrot.slane %v276, %v280
    %v299 = vunpack.c.l.b16 %v260
    %v300 = vunpack.c.l.b16 %v261
    %v301 = vunpack.c.l.b16 %v262
    %v302 = vunpack.c.l.b16 %v263
    %v303 = vunpack.c.l.b16 %v264
    %v304 = vunpack.c.l.b16 %v265
    %v305 = vunpack.c.l.b16 %v266
    %v306 = vunpack.c.l.b16 %v267
    %v307 = vunpack.c.l.b16 %v268
    %v308 = vunpack.c.l.b16 %v269
    %v309 = vunpack.c.l.b16 %v270
    %v310 = vunpack.c.l.b16 %v271
    %v311 = vunpack.c.l.b16 %v272
    %v312 = vunpack.c.l.b16 %v273
    %v313 = vunpack.c.l.b16 %v274
    %v314 = vunpack.c.l.b16 %v275
    %v315 = vpack.c.b16 %v300, %v299
    %v316 = vpack.c.b16 %v302, %v301
    %v317 = vpack.c.b16 %v304, %v303
    %v318 = vpack.c.b16 %v306, %v305
    %v319 = vpack.c.b16 %v308, %v307
    %v320 = vpack.c.b16 %v310, %v309
    %v321 = vpack.c.b16 %v312, %v311
    %v322 = vpack.c.b16 %v314, %v313
    %331 = vmatprep.subr.bf16.mxu0 0
    %332 = vmatpush1.bf16.msra.mxu0 %v322
    %333 = vmatprep.subr.bf16.mxu0 0
    %334 = vmatpush1.bf16.msra.mxu0 %v321
    %335 = vmatprep.subr.bf16.mxu0 0
    %336 = vmatpush1.bf16.msra.mxu0 %v320
    %337 = vmatprep.subr.bf16.mxu0 0
    %338 = vmatpush1.bf16.msra.mxu0 %v319
    %339 = vmatprep.subr.bf16.mxu0 0
    %340 = vmatpush1.bf16.msra.mxu0 %v318
    %341 = vmatprep.subr.bf16.mxu0 0
    %342 = vmatpush1.bf16.msra.mxu0 %v317
    %343 = vmatprep.subr.bf16.mxu0 0
    %344 = vmatpush1.bf16.msra.mxu0 %v316
    %345 = vmatprep.subr.bf16.mxu0 0
    %346 = vmatpush1.bf16.msra.mxu0 %v315
    %347 = vmatprep.subr.bf16.mxu0 0
    %348 = vmatpush2.bf16.msra.mxu0 0
    %349 = vmatprep.subr.bf16.mxu0 0
    %350 = vmatpush2.bf16.msra.mxu0 0
    %351 = vmatprep.subr.bf16.mxu0 0
    %352 = vmatpush2.bf16.msra.mxu0 0
    %353 = vmatprep.subr.bf16.mxu0 0
    %354 = vmatpush2.bf16.msra.mxu0 0
    %355 = vmatprep.subr.bf16.mxu0 0
    %356 = vmatpush2.bf16.msra.mxu0 0
    %357 = vmatprep.subr.bf16.mxu0 0
    %358 = vmatpush2.bf16.msra.mxu0 0
    %359 = vmatprep.subr.bf16.mxu0 0
    %360 = vmatpush2.bf16.msra.mxu0 0
    %361 = vmatprep.subr.bf16.mxu0 0
    %362 = vmatpush2.bf16.msra.mxu0 0
    %363 = vmatprep.mubr.bf16.mxu0 0
    %364 = vmatmul.mubr.bf16.gmra.mxu0 %v259
    %v365 = vpop.f32.mrf.mxu0
    %v366 = vadd.f32 %v281, %v365
    %v367 = vpop.f32.mrf.mxu0
    %v368 = vpop.f32.mrf.mxu0
    %v369 = vpop.f32.mrf.mxu0
    %370 = vdwg.mxu0
    %v371 = vpack.c.bf16 %v366, %v366
    %v372 = vld [vmem:[%s7] sm:$0xf]
    %v373 = vld [vmem:[%s7 + $0x4] sm:$0xf]
    %v374 = vld [vmem:[%s7 + $0x8] sm:$0xf]
    %v375 = vld [vmem:[%s7 + $0xc] sm:$0xf]
    %v376 = vld [vmem:[%s7 + $0x10] sm:$0xf]
    %v377 = vld [vmem:[%s7 + $0x14] sm:$0xf]
    %v378 = vld [vmem:[%s7 + $0x18] sm:$0xf]
    %v379 = vld [vmem:[%s7 + $0x1c] sm:$0xf]
    %v380 = vld [vmem:[%s7 + $0x20] sm:$0xf]
    %v381 = vld [vmem:[%s7 + $0x24] sm:$0xf]
    %v382 = vld [vmem:[%s7 + $0x28] sm:$0xf]
    %v383 = vld [vmem:[%s7 + $0x2c] sm:$0xf]
    %v384 = vld [vmem:[%s7 + $0x30] sm:$0xf]
    %v385 = vld [vmem:[%s7 + $0x34] sm:$0xf]
    %v386 = vld [vmem:[%s7 + $0x38] sm:$0xf]
    %v387 = vld [vmem:[%s7 + $0x3c] sm:$0xf]
    %v388 = vld [vmem:[%s8] sm:$0x1]
    %v390 = vlaneseq
    %v391 = vshrl.u32 %v390, 7
    %v392 = vsub.s32 0, %v391
    %v393 = vrot.slane %v388, %v392
    %v411 = vunpack.c.l.b16 %v372
    %v412 = vunpack.c.l.b16 %v373
    %v413 = vunpack.c.l.b16 %v374
    %v414 = vunpack.c.l.b16 %v375
    %v415 = vunpack.c.l.b16 %v376
    %v416 = vunpack.c.l.b16 %v377
    %v417 = vunpack.c.l.b16 %v378
    %v418 = vunpack.c.l.b16 %v379
    %v419 = vunpack.c.l.b16 %v380
    %v420 = vunpack.c.l.b16 %v381
    %v421 = vunpack.c.l.b16 %v382
    %v422 = vunpack.c.l.b16 %v383
    %v423 = vunpack.c.l.b16 %v384
    %v424 = vunpack.c.l.b16 %v385
    %v425 = vunpack.c.l.b16 %v386
    %v426 = vunpack.c.l.b16 %v387
    %v427 = vpack.c.b16 %v412, %v411
    %v428 = vpack.c.b16 %v414, %v413
    %v429 = vpack.c.b16 %v416, %v415
    %v430 = vpack.c.b16 %v418, %v417
    %v431 = vpack.c.b16 %v420, %v419
    %v432 = vpack.c.b16 %v422, %v421
    %v433 = vpack.c.b16 %v424, %v423
    %v434 = vpack.c.b16 %v426, %v425
    %443 = vmatprep.subr.bf16.mxu0 0
    %444 = vmatpush1.bf16.msra.mxu0 %v434
    %445 = vmatprep.subr.bf16.mxu0 0
    %446 = vmatpush1.bf16.msra.mxu0 %v433
    %447 = vmatprep.subr.bf16.mxu0 0
    %448 = vmatpush1.bf16.msra.mxu0 %v432
    %449 = vmatprep.subr.bf16.mxu0 0
    %450 = vmatpush1.bf16.msra.mxu0 %v431
    %451 = vmatprep.subr.bf16.mxu0 0
    %452 = vmatpush1.bf16.msra.mxu0 %v430
    %453 = vmatprep.subr.bf16.mxu0 0
    %454 = vmatpush1.bf16.msra.mxu0 %v429
    %455 = vmatprep.subr.bf16.mxu0 0
    %456 = vmatpush1.bf16.msra.mxu0 %v428
    %457 = vmatprep.subr.bf16.mxu0 0
    %458 = vmatpush1.bf16.msra.mxu0 %v427
    %459 = vmatprep.subr.bf16.mxu0 0
    %460 = vmatpush2.bf16.msra.mxu0 0
    %461 = vmatprep.subr.bf16.mxu0 0
    %462 = vmatpush2.bf16.msra.mxu0 0
    %463 = vmatprep.subr.bf16.mxu0 0
    %464 = vmatpush2.bf16.msra.mxu0 0
    %465 = vmatprep.subr.bf16.mxu0 0
    %466 = vmatpush2.bf16.msra.mxu0 0
    %467 = vmatprep.subr.bf16.mxu0 0
    %468 = vmatpush2.bf16.msra.mxu0 0
    %469 = vmatprep.subr.bf16.mxu0 0
    %470 = vmatpush2.bf16.msra.mxu0 0
    %471 = vmatprep.subr.bf16.mxu0 0
    %472 = vmatpush2.bf16.msra.mxu0 0
    %473 = vmatprep.subr.bf16.mxu0 0
    %474 = vmatpush2.bf16.msra.mxu0 0
    %475 = vmatprep.mubr.bf16.mxu0 0
    %476 = vmatmul.mubr.bf16.gmra.mxu0 %v371
    %v477 = vpop.f32.mrf.mxu0
    %v478 = vadd.f32 %v393, %v477
    %v479 = vpop.f32.mrf.mxu0
    %v480 = vpop.f32.mrf.mxu0
    %v481 = vpop.f32.mrf.mxu0
    %482 = vdwg.mxu0
    %v483 = vmax.f32 %v478, 0.0
    %484 = vst [vmem:[#allocation2] sm:$0xff] %v483
    // Predicated region
    $region38: #{three_hidden_layer_mlp.1} parent=1 // pred_check
      _
    $region39: #{three_hidden_layer_mlp.1} parent=1 // pred_check_branch
      %486 = sbr.rel (0) target = $region41
    $region40: #{three_hidden_layer_mlp.1} parent=1 // pred_region
      %s488 = ssub.s32 128, 128
      %489 = vsyncadd [#allocation3], %s488
      %s491 = sshll.u32 [#allocation2], 4
      %s492 = int_to_ptr.vmem [resolvable:$true] %s491
      %494 = dma.vmem_to_hbm [thread:$0]  %s492, 128, %s9, [#allocation3]
    $region41: #{three_hidden_layer_mlp.1} parent=1 // pred_fallthru
      _
    // Predicated region
    $region42: #{three_hidden_layer_mlp.1} parent=1 // pred_check
      _
    $region43: #{three_hidden_layer_mlp.1} parent=1 // pred_check_branch
      %496 = sbr.rel (0) target = $region45
    $region44: #{three_hidden_layer_mlp.1} parent=1 // pred_region
      %497 = dma.done [#allocation3], 128
    $region45: #{three_hidden_layer_mlp.1} parent=1 // pred_fallthru
      _
    %498 = vsyncpa [#allocation3], 1

</llo_original>
